<compile_context>
chip_gen: v7x
topology: tpu7x:2x2x1
jax: 0.10.0
libtpu: 0.0.40
codegen_flags: <defaults>
</compile_context>

<pallas_src>
import functools

import jax
import jax.numpy as jnp
from jax.experimental import pallas as pl
from jax.experimental.pallas import tpu as pltpu


def _prelu(x, alpha):
    return jnp.where(x >= 0, x, alpha * x)


# ----------------------------- fused Pallas kernel ---------------------------

def _fused_kernel(pk_ref, w1_ref, w2_ref, w3_ref,
                  s1_ref, b1_ref, s2_ref, b2_ref, s3_ref, b3_ref,
                  out_ref, idx_ref, *,
                  alphas, Cin, Cint, Cout, Ho, Wo, W):
    a1, a2, a3, a_out = alphas
    M = Ho * Wo
    f32 = jnp.float32
    bf16 = jnp.bfloat16

    # Packed taps, channels-major: rows ordered ((dy, dx), cin), lanes = (y, x) flat.
    a = pk_ref[...]                                        # (4*Cin, M) f32

    # ---- per-lane output coordinates (y, x) via iota (no int division needed) ----
    lane = jax.lax.broadcasted_iota(jnp.int32, (1, M), 1)
    if Wo & (Wo - 1) == 0:                                 # Wo power of two (shift/and)
        yq = lane >> (Wo.bit_length() - 1)
        xq = lane & (Wo - 1)
    else:
        yq = lane // Wo
        xq = lane - yq * Wo

    # ---- main branch: 2x2 stride-2 max pool + PyTorch-style flat indices ---------
    v = a[0:Cin, :]                                        # tap (0,0)
    off = jnp.zeros((Cin, M), jnp.int32)
    # scan order (0,0),(0,1),(1,0),(1,1); strict '>' keeps the first max (PyTorch rule)
    for k, o in ((1, 1), (2, W), (3, W + 1)):
        t = a[k * Cin:(k + 1) * Cin, :]
        better = t > v
        v = jnp.where(better, t, v)
        off = jnp.where(better, o, off)
    idx_ref[...] = (2 * yq * W + 2 * xq) + off             # int32 flat indices

    # ---- ext conv1: 2x2 stride-2 conv as ONE matmul + BN + PReLU ------------------
    y1 = jnp.dot(w1_ref[...], a.astype(bf16), preferred_element_type=f32)
    h1 = _prelu(y1 * s1_ref[...] + b1_ref[...], a1)        # (Cint, M) f32

    # ---- ext conv2: 3x3 pad-1 conv: 9 zero-padded lane-shifted taps, one dot ------
    zpad = jnp.zeros((Cint, Wo + 1), f32)
    h1p = jnp.concatenate([zpad, h1, zpad], axis=1)        # (Cint, M + 2*Wo + 2)
    taps = []
    for dy in range(3):
        for dx in range(3):
            t = h1p[:, dy * Wo + dx: dy * Wo + dx + M]     # h1 shifted by (dy-1, dx-1)
            conds = []
            if dy == 0:
                conds.append(yq >= 1)
            if dy == 2:
                conds.append(yq <= Ho - 2)
            if dx == 0:
                conds.append(xq >= 1)
            if dx == 2:
                conds.append(xq <= Wo - 2)
            if conds:
                mask = conds[0]
                for c in conds[1:]:
                    mask = jnp.logical_and(mask, c)
                t = jnp.where(mask, t, jnp.zeros_like(t))
            taps.append(t)
    tcat = jnp.concatenate(taps, axis=0)                   # (9*Cint, M)
    y2 = jnp.dot(w2_ref[...], tcat.astype(bf16), preferred_element_type=f32)
    h2 = _prelu(y2 * s2_ref[...] + b2_ref[...], a2)        # (Cint, M)

    # ---- ext conv3 (1x1) + BN + PReLU; Dropout2d(p=0) is the identity -------------
    y3 = jnp.dot(w3_ref[...], h2.astype(bf16), preferred_element_type=f32)
    ext = _prelu(y3 * s3_ref[...] + b3_ref[...], a3)       # (Cout, M)

    # ---- channel-pad main branch with zeros (no MXU), residual add, output PReLU --
    if Cout > Cin:
        main = jnp.concatenate([v, jnp.zeros((Cout - Cin, M), f32)], axis=0)
    else:
        main = v
    out_ref[...] = _prelu(main + ext, a_out)


def _fused_call(pk, w1m, w2m, w3m, s1, b1, s2, b2, s3, b3, *,
                alphas, Ho, Wo, W, Cin, Cint, Cout):
    N, K1, M = pk.shape
    kernel = functools.partial(_fused_kernel, alphas=alphas, Cin=Cin, Cint=Cint,
                               Cout=Cout, Ho=Ho, Wo=Wo, W=W)
    full = lambda n: (0, 0)
    return pl.pallas_call(
        kernel,
        out_shape=(jax.ShapeDtypeStruct((N, Cout, M), jnp.float32),
                   jax.ShapeDtypeStruct((N, Cin, M), jnp.int32)),
        grid=(N,),
        in_specs=[
            pl.BlockSpec((None, K1, M), lambda n: (n, 0, 0)),   # packed pool/conv1 taps
            pl.BlockSpec((Cint, K1), full),                     # w1 (bf16)
            pl.BlockSpec((Cint, 9 * Cint), full),               # w2 stacked (bf16)
            pl.BlockSpec((Cout, Cint), full),                   # w3 (bf16)
            pl.BlockSpec((Cint, 1), full),                      # s1
            pl.BlockSpec((Cint, 1), full),                      # b1
            pl.BlockSpec((Cint, 1), full),                      # s2
            pl.BlockSpec((Cint, 1), full),                      # b2
            pl.BlockSpec((Cout, 1), full),                      # s3
            pl.BlockSpec((Cout, 1), full),                      # b3
        ],
        out_specs=(pl.BlockSpec((None, Cout, M), lambda n: (n, 0, 0)),
                   pl.BlockSpec((None, Cin, M), lambda n: (n, 0, 0))),
        compiler_params=pltpu.CompilerParams(
            dimension_semantics=("parallel",),
            vmem_limit_bytes=32 * 1024 * 1024),
    )(pk, w1m, w2m, w3m, s1, b1, s2, b2, s3, b3)


# ----------------------------- parameters & forward --------------------------

def init_params(key, in_channels, out_channels, internal_ratio=4):
    internal = in_channels // internal_ratio if internal_ratio > 0 else in_channels
    ks = jax.random.split(key, 6)

    def bn(k, c):
        k1, k2, k3, k4 = jax.random.split(k, 4)
        gamma = 1.0 + 0.1 * jax.random.normal(k1, (c,), jnp.float32)
        beta = 0.1 * jax.random.normal(k2, (c,), jnp.float32)
        mean = 0.1 * jax.random.normal(k3, (c,), jnp.float32)
        var = jax.random.uniform(k4, (c,), jnp.float32, 0.8, 1.2)
        scale = gamma / jnp.sqrt(var + 1e-3)               # eps = 0.001
        shift = beta - mean * scale
        return scale, shift

    w1 = (1.0 / (4 * in_channels) ** 0.5) * jax.random.normal(
        ks[0], (internal, in_channels, 2, 2), jnp.float32)
    w2 = (1.0 / (9 * internal) ** 0.5) * jax.random.normal(
        ks[1], (internal, internal, 3, 3), jnp.float32)
    w3 = (1.0 / internal ** 0.5) * jax.random.normal(
        ks[2], (out_channels, internal, 1, 1), jnp.float32)
    s1, b1 = bn(ks[3], internal)
    s2, b2 = bn(ks[4], internal)
    s3, b3 = bn(ks[5], out_channels)
    alphas = (0.25, 0.25, 0.25, 0.25)                      # PReLU default init (scalar)
    return dict(w1=w1, w2=w2, w3=w3, s1=s1, b1=b1, s2=s2, b2=b2, s3=s3, b3=b3,
                alphas=alphas)


def downsampling_bottleneck(x_nchw, p):
    N, Cin, H, W = x_nchw.shape
    Ho, Wo = H // 2, W // 2
    M = Ho * Wo
    Cint = p['w1'].shape[0]
    Cout = p['w3'].shape[0]
    assert Cout >= Cin, "main-branch channel padding assumes out_channels >= in_channels"

    # Packed taps, channels-major: (N, 4*Cin, Ho*Wo) with row order ((dy, dx), cin).
    # Serves as the 4 max-pool taps AND conv1's im2col operand (same byte count as x).
    # TODO(synk): do this packing in-kernel from the raw NCHW block (stride-2 lane
    #             deinterleave) to cut HBM traffic from ~3x to ~1x of the input.
    xr = x_nchw.reshape(N, Cin, Ho, 2, Wo, 2)
    pk = jnp.transpose(xr, (0, 3, 5, 1, 2, 4)).reshape(N, 4 * Cin, M)

    bf = jnp.bfloat16
    w1m = jnp.transpose(p['w1'], (0, 2, 3, 1)).reshape(Cint, 4 * Cin).astype(bf)
    w2m = jnp.transpose(p['w2'], (0, 2, 3, 1)).reshape(Cint, 9 * Cint).astype(bf)
    w3m = p['w3'][:, :, 0, 0].astype(bf)                   # (Cout, Cint)

    col = lambda v: v.reshape(-1, 1).astype(jnp.float32)   # per-channel BN scale/shift
    out, idx = _fused_call(pk, w1m, w2m, w3m,
                           col(p['s1']), col(p['b1']), col(p['s2']), col(p['b2']),
                           col(p['s3']), col(p['b3']),
                           alphas=p['alphas'], Ho=Ho, Wo=Wo, W=W,
                           Cin=Cin, Cint=Cint, Cout=Cout)

    # Channels-major kernel layout == NCHW flat: only FREE reshapes here, no transpose.
    return out.reshape(N, Cout, Ho, Wo), idx.reshape(N, Cin, Ho, Wo)


# ----------------------------- pure-JAX reference ----------------------------

def reference(x, p):
    N, Cin, H, W = x.shape
    Ho, Wo = H // 2, W // 2
    Cout = p['w3'].shape[0]
    a1, a2, a3, a_out = p['alphas']
    dn = ('NCHW', 'OIHW', 'NCHW')
    hp = jax.lax.Precision.HIGHEST

    def bn(y, s, b):
        return y * s.reshape(1, -1, 1, 1) + b.reshape(1, -1, 1, 1)

    h = jax.lax.conv_general_dilated(x, p['w1'], (2, 2), 'VALID',
                                     dimension_numbers=dn, precision=hp)
    h = _prelu(bn(h, p['s1'], p['b1']), a1)
    h = jax.lax.conv_general_dilated(h, p['w2'], (1, 1), ((1, 1), (1, 1)),
                                     dimension_numbers=dn, precision=hp)
    h = _prelu(bn(h, p['s2'], p['b2']), a2)
    h = jax.lax.conv_general_dilated(h, p['w3'], (1, 1), 'VALID',
                                     dimension_numbers=dn, precision=hp)
    ext = _prelu(bn(h, p['s3'], p['b3']), a3)

    main = jax.lax.reduce_window(x, -jnp.inf, jax.lax.max,
                                 (1, 1, 2, 2), (1, 1, 2, 2), 'VALID')
    main = jnp.pad(main, ((0, 0), (0, Cout - Cin), (0, 0), (0, 0)))
    out = _prelu(main + ext, a_out)

    x4 = x.reshape(N, Cin, Ho, 2, Wo, 2)
    taps = jnp.stack([x4[:, :, :, 0, :, 0], x4[:, :, :, 0, :, 1],
                      x4[:, :, :, 1, :, 0], x4[:, :, :, 1, :, 1]], axis=-1)
    which = jnp.argmax(taps, axis=-1)                      # first max, like PyTorch
    offs = jnp.array([0, 1, W, W + 1], jnp.int32)
    base = (2 * jnp.arange(Ho, dtype=jnp.int32)[:, None]) * W \
        + 2 * jnp.arange(Wo, dtype=jnp.int32)[None, :]
    idx = base[None, None] + offs[which]
    return out, idx.astype(jnp.int32)


# ----------------------------- main -------------------------------------------

if __name__ == "__main__":
    N, Cin, H, W = 2, 8, 16, 16
    internal_ratio, Cout = 4, 16

    key = jax.random.PRNGKey(0)
    kx, kp = jax.random.split(key)
    x = jax.random.normal(kx, (N, Cin, H, W), jnp.float32)
    params = init_params(kp, Cin, Cout, internal_ratio)

    out, idx = downsampling_bottleneck(x, params)
    jax.block_until_ready(out)
    jax.block_until_ready(idx)

    out_ref, idx_ref = reference(x, params)
    assert out.shape == (N, Cout, H // 2, W // 2) and out.dtype == jnp.float32
    assert idx.shape == (N, Cin, H // 2, W // 2) and idx.dtype == jnp.int32
    assert jnp.allclose(out, out_ref, atol=5e-2, rtol=5e-2), "out mismatch"
    assert jnp.array_equal(idx, idx_ref), "max_indices mismatch"
    print("KERNEL_OK")
</pallas_src>

<mosaic_0001>
module attributes {stable_mosaic.version = 11 : i64} {
  func.func @_fused_kernel(%arg0: i32, %arg1: memref<1x32x64xf32, #tpu.memory_space<vmem>>, %arg2: memref<2x32xbf16, #tpu.memory_space<vmem>>, %arg3: memref<2x18xbf16, #tpu.memory_space<vmem>>, %arg4: memref<16x2xbf16, #tpu.memory_space<vmem>>, %arg5: memref<2x1xf32, #tpu.memory_space<vmem>>, %arg6: memref<2x1xf32, #tpu.memory_space<vmem>>, %arg7: memref<2x1xf32, #tpu.memory_space<vmem>>, %arg8: memref<2x1xf32, #tpu.memory_space<vmem>>, %arg9: memref<16x1xf32, #tpu.memory_space<vmem>>, %arg10: memref<16x1xf32, #tpu.memory_space<vmem>>, %arg11: memref<1x16x64xf32, #tpu.memory_space<vmem>>, %arg12: memref<1x8x64xi32, #tpu.memory_space<vmem>>) attributes {dimension_semantics = [#tpu.dimension_semantics<parallel>], iteration_bounds = array<i64: 2>, scalar_prefetch = 0 : i64, scratch_operands = 0 : i64, tpu.core_type = #tpu.core_type<tc>, window_params = [{transform_indices = @transform_0, window_bounds = array<i64: 1, 32, 64>}, {pipeline_mode = #tpu.pipeline_mode<synchronous>, transform_indices = @transform_1, window_bounds = array<i64: 2, 32>}, {pipeline_mode = #tpu.pipeline_mode<synchronous>, transform_indices = @transform_2, window_bounds = array<i64: 2, 18>}, {pipeline_mode = #tpu.pipeline_mode<synchronous>, transform_indices = @transform_3, window_bounds = array<i64: 16, 2>}, {pipeline_mode = #tpu.pipeline_mode<synchronous>, transform_indices = @transform_4, window_bounds = array<i64: 2, 1>}, {pipeline_mode = #tpu.pipeline_mode<synchronous>, transform_indices = @transform_5, window_bounds = array<i64: 2, 1>}, {pipeline_mode = #tpu.pipeline_mode<synchronous>, transform_indices = @transform_6, window_bounds = array<i64: 2, 1>}, {pipeline_mode = #tpu.pipeline_mode<synchronous>, transform_indices = @transform_7, window_bounds = array<i64: 2, 1>}, {pipeline_mode = #tpu.pipeline_mode<synchronous>, transform_indices = @transform_8, window_bounds = array<i64: 16, 1>}, {pipeline_mode = #tpu.pipeline_mode<synchronous>, transform_indices = @transform_9, window_bounds = array<i64: 16, 1>}, {transform_indices = @transform_10, window_bounds = array<i64: 1, 16, 64>}, {transform_indices = @transform_11, window_bounds = array<i64: 1, 8, 64>}]} {
    %c0 = arith.constant 0 : index
    %c0_0 = arith.constant 0 : index
    %c0_1 = arith.constant 0 : index
    %0 = vector.load %arg1[%c0, %c0_0, %c0_1] : memref<1x32x64xf32, #tpu.memory_space<vmem>>, vector<1x32x64xf32>
    %1 = vector.shape_cast %0 : vector<1x32x64xf32> to vector<32x64xf32>
    %2 = tpu.iota {dimensions = array<i32: 1>} : vector<1x64xi32>
    %c3_i32 = arith.constant 3 : i32
    %3 = vector.broadcast %c3_i32 : i32 to vector<1x64xi32>
    %4 = arith.shrsi %2, %3 : vector<1x64xi32>
    %c7_i32 = arith.constant 7 : i32
    %5 = vector.broadcast %c7_i32 : i32 to vector<1x64xi32>
    %6 = arith.andi %2, %5 : vector<1x64xi32>
    %7 = vector.extract_strided_slice %1 {offsets = [0, 0], sizes = [8, 64], strides = [1, 1]} : vector<32x64xf32> to vector<8x64xf32>
    %c0_i32 = arith.constant 0 : i32
    %8 = vector.broadcast %c0_i32 : i32 to vector<8x64xi32>
    %9 = vector.extract_strided_slice %1 {offsets = [8, 0], sizes = [8, 64], strides = [1, 1]} : vector<32x64xf32> to vector<8x64xf32>
    %10 = arith.cmpf ogt, %9, %7 : vector<8x64xf32>
    %11 = arith.select %10, %9, %7 : vector<8x64xi1>, vector<8x64xf32>
    %c1_i32 = arith.constant 1 : i32
    %12 = vector.broadcast %c1_i32 : i32 to vector<8x64xi32>
    %13 = arith.select %10, %12, %8 : vector<8x64xi1>, vector<8x64xi32>
    %14 = vector.extract_strided_slice %1 {offsets = [16, 0], sizes = [8, 64], strides = [1, 1]} : vector<32x64xf32> to vector<8x64xf32>
    %15 = arith.cmpf ogt, %14, %11 : vector<8x64xf32>
    %16 = arith.select %15, %14, %11 : vector<8x64xi1>, vector<8x64xf32>
    %c16_i32 = arith.constant 16 : i32
    %17 = vector.broadcast %c16_i32 : i32 to vector<8x64xi32>
    %18 = arith.select %15, %17, %13 : vector<8x64xi1>, vector<8x64xi32>
    %19 = vector.extract_strided_slice %1 {offsets = [24, 0], sizes = [8, 64], strides = [1, 1]} : vector<32x64xf32> to vector<8x64xf32>
    %20 = arith.cmpf ogt, %19, %16 : vector<8x64xf32>
    %21 = arith.select %20, %19, %16 : vector<8x64xi1>, vector<8x64xf32>
    %c17_i32 = arith.constant 17 : i32
    %22 = vector.broadcast %c17_i32 : i32 to vector<8x64xi32>
    %23 = arith.select %20, %22, %18 : vector<8x64xi1>, vector<8x64xi32>
    %c2_i32 = arith.constant 2 : i32
    %24 = vector.broadcast %c2_i32 : i32 to vector<1x64xi32>
    %25 = arith.muli %24, %4 : vector<1x64xi32>
    %c16_i32_2 = arith.constant 16 : i32
    %26 = vector.broadcast %c16_i32_2 : i32 to vector<1x64xi32>
    %27 = arith.muli %25, %26 : vector<1x64xi32>
    %c2_i32_3 = arith.constant 2 : i32
    %28 = vector.broadcast %c2_i32_3 : i32 to vector<1x64xi32>
    %29 = arith.muli %28, %6 : vector<1x64xi32>
    %30 = arith.addi %27, %29 : vector<1x64xi32>
    %31 = vector.broadcast %30 : vector<1x64xi32> to vector<8x64xi32>
    %32 = arith.addi %31, %23 : vector<8x64xi32>
    %c0_4 = arith.constant 0 : index
    %c0_5 = arith.constant 0 : index
    %c0_6 = arith.constant 0 : index
    %33 = vector.load %arg12[%c0_4, %c0_5, %c0_6] : memref<1x8x64xi32, #tpu.memory_space<vmem>>, vector<1x8x64xi32>
    %34 = vector.shape_cast %33 : vector<1x8x64xi32> to vector<8x64xi32>
    %35 = vector.shape_cast %32 : vector<8x64xi32> to vector<1x8x64xi32>
    tpu.vector_store %arg12[%c0_4, %c0_5, %c0_6], %35 {strides = array<i32>} : memref<1x8x64xi32, #tpu.memory_space<vmem>>, vector<1x8x64xi32>,
    %c0_7 = arith.constant 0 : index
    %c0_8 = arith.constant 0 : index
    %36 = vector.load %arg2[%c0_7, %c0_8] : memref<2x32xbf16, #tpu.memory_space<vmem>>, vector<2x32xbf16>
    %37 = arith.truncf %1 : vector<32x64xf32> to vector<32x64xbf16>
    %cst = arith.constant dense<0.000000e+00> : vector<2x64xf32>
    %38 = tpu.matmul %36, %37, %cst {dimension_numbers = #tpu.dot_dimension_numbers<[1], [0], [0], [1], [0, 0, 1, 1], [], []>} : vector<2x32xbf16>, vector<32x64xbf16>, vector<2x64xf32> -> vector<2x64xf32>
    %c0_9 = arith.constant 0 : index
    %c0_10 = arith.constant 0 : index
    %39 = vector.load %arg5[%c0_9, %c0_10] : memref<2x1xf32, #tpu.memory_space<vmem>>, vector<2x1xf32>
    %40 = vector.broadcast %39 : vector<2x1xf32> to vector<2x64xf32>
    %41 = arith.mulf %38, %40 : vector<2x64xf32>
    %c0_11 = arith.constant 0 : index
    %c0_12 = arith.constant 0 : index
    %42 = vector.load %arg6[%c0_11, %c0_12] : memref<2x1xf32, #tpu.memory_space<vmem>>, vector<2x1xf32>
    %43 = vector.broadcast %42 : vector<2x1xf32> to vector<2x64xf32>
    %44 = arith.addf %41, %43 : vector<2x64xf32>
    %cst_13 = arith.constant 0.000000e+00 : f32
    %45 = vector.broadcast %cst_13 : f32 to vector<2x64xf32>
    %46 = arith.cmpf oge, %44, %45 : vector<2x64xf32>
    %cst_14 = arith.constant 2.500000e-01 : f32
    %47 = vector.broadcast %cst_14 : f32 to vector<2x64xf32>
    %48 = arith.mulf %47, %44 : vector<2x64xf32>
    %49 = arith.select %46, %44, %48 : vector<2x64xi1>, vector<2x64xf32>
    %cst_15 = arith.constant 0.000000e+00 : f32
    %50 = vector.broadcast %cst_15 : f32 to vector<2x9xf32>
    %51 = tpu.concatenate %50, %49, %50 in 1 : vector<2x9xf32>, vector<2x64xf32>, vector<2x9xf32> -> vector<2x82xf32>
    %52 = vector.extract_strided_slice %51 {offsets = [0, 0], sizes = [2, 64], strides = [1, 1]} : vector<2x82xf32> to vector<2x64xf32>
    %c1_i32_16 = arith.constant 1 : i32
    %53 = vector.broadcast %c1_i32_16 : i32 to vector<1x64xi32>
    %54 = arith.cmpi sge, %4, %53 : vector<1x64xi32>
    %c1_i32_17 = arith.constant 1 : i32
    %55 = vector.broadcast %c1_i32_17 : i32 to vector<1x64xi32>
    %56 = arith.cmpi sge, %6, %55 : vector<1x64xi32>
    %57 = arith.andi %54, %56 : vector<1x64xi1>
    %cst_18 = arith.constant 0.000000e+00 : f32
    %58 = vector.broadcast %cst_18 : f32 to vector<2x64xf32>
    %59 = vector.shape_cast %57 : vector<1x64xi1> to vector<1x64xi1>
    %60 = vector.broadcast %59 : vector<1x64xi1> to vector<2x64xi1>
    %61 = arith.select %60, %52, %58 : vector<2x64xi1>, vector<2x64xf32>
    %62 = vector.extract_strided_slice %51 {offsets = [0, 1], sizes = [2, 64], strides = [1, 1]} : vector<2x82xf32> to vector<2x64xf32>
    %c1_i32_19 = arith.constant 1 : i32
    %63 = vector.broadcast %c1_i32_19 : i32 to vector<1x64xi32>
    %64 = arith.cmpi sge, %4, %63 : vector<1x64xi32>
    %cst_20 = arith.constant 0.000000e+00 : f32
    %65 = vector.broadcast %cst_20 : f32 to vector<2x64xf32>
    %66 = vector.shape_cast %64 : vector<1x64xi1> to vector<1x64xi1>
    %67 = vector.broadcast %66 : vector<1x64xi1> to vector<2x64xi1>
    %68 = arith.select %67, %62, %65 : vector<2x64xi1>, vector<2x64xf32>
    %69 = vector.extract_strided_slice %51 {offsets = [0, 2], sizes = [2, 64], strides = [1, 1]} : vector<2x82xf32> to vector<2x64xf32>
    %c1_i32_21 = arith.constant 1 : i32
    %70 = vector.broadcast %c1_i32_21 : i32 to vector<1x64xi32>
    %71 = arith.cmpi sge, %4, %70 : vector<1x64xi32>
    %c6_i32 = arith.constant 6 : i32
    %72 = vector.broadcast %c6_i32 : i32 to vector<1x64xi32>
    %73 = arith.cmpi sle, %6, %72 : vector<1x64xi32>
    %74 = arith.andi %71, %73 : vector<1x64xi1>
    %cst_22 = arith.constant 0.000000e+00 : f32
    %75 = vector.broadcast %cst_22 : f32 to vector<2x64xf32>
    %76 = vector.shape_cast %74 : vector<1x64xi1> to vector<1x64xi1>
    %77 = vector.broadcast %76 : vector<1x64xi1> to vector<2x64xi1>
    %78 = arith.select %77, %69, %75 : vector<2x64xi1>, vector<2x64xf32>
    %79 = vector.extract_strided_slice %51 {offsets = [0, 8], sizes = [2, 64], strides = [1, 1]} : vector<2x82xf32> to vector<2x64xf32>
    %c1_i32_23 = arith.constant 1 : i32
    %80 = vector.broadcast %c1_i32_23 : i32 to vector<1x64xi32>
    %81 = arith.cmpi sge, %6, %80 : vector<1x64xi32>
    %cst_24 = arith.constant 0.000000e+00 : f32
    %82 = vector.broadcast %cst_24 : f32 to vector<2x64xf32>
    %83 = vector.shape_cast %81 : vector<1x64xi1> to vector<1x64xi1>
    %84 = vector.broadcast %83 : vector<1x64xi1> to vector<2x64xi1>
    %85 = arith.select %84, %79, %82 : vector<2x64xi1>, vector<2x64xf32>
    %86 = vector.extract_strided_slice %51 {offsets = [0, 9], sizes = [2, 64], strides = [1, 1]} : vector<2x82xf32> to vector<2x64xf32>
    %87 = vector.extract_strided_slice %51 {offsets = [0, 10], sizes = [2, 64], strides = [1, 1]} : vector<2x82xf32> to vector<2x64xf32>
    %c6_i32_25 = arith.constant 6 : i32
    %88 = vector.broadcast %c6_i32_25 : i32 to vector<1x64xi32>
    %89 = arith.cmpi sle, %6, %88 : vector<1x64xi32>
    %cst_26 = arith.constant 0.000000e+00 : f32
    %90 = vector.broadcast %cst_26 : f32 to vector<2x64xf32>
    %91 = vector.shape_cast %89 : vector<1x64xi1> to vector<1x64xi1>
    %92 = vector.broadcast %91 : vector<1x64xi1> to vector<2x64xi1>
    %93 = arith.select %92, %87, %90 : vector<2x64xi1>, vector<2x64xf32>
    %94 = vector.extract_strided_slice %51 {offsets = [0, 16], sizes = [2, 64], strides = [1, 1]} : vector<2x82xf32> to vector<2x64xf32>
    %c6_i32_27 = arith.constant 6 : i32
    %95 = vector.broadcast %c6_i32_27 : i32 to vector<1x64xi32>
    %96 = arith.cmpi sle, %4, %95 : vector<1x64xi32>
    %c1_i32_28 = arith.constant 1 : i32
    %97 = vector.broadcast %c1_i32_28 : i32 to vector<1x64xi32>
    %98 = arith.cmpi sge, %6, %97 : vector<1x64xi32>
    %99 = arith.andi %96, %98 : vector<1x64xi1>
    %cst_29 = arith.constant 0.000000e+00 : f32
    %100 = vector.broadcast %cst_29 : f32 to vector<2x64xf32>
    %101 = vector.shape_cast %99 : vector<1x64xi1> to vector<1x64xi1>
    %102 = vector.broadcast %101 : vector<1x64xi1> to vector<2x64xi1>
    %103 = arith.select %102, %94, %100 : vector<2x64xi1>, vector<2x64xf32>
    %104 = vector.extract_strided_slice %51 {offsets = [0, 17], sizes = [2, 64], strides = [1, 1]} : vector<2x82xf32> to vector<2x64xf32>
    %c6_i32_30 = arith.constant 6 : i32
    %105 = vector.broadcast %c6_i32_30 : i32 to vector<1x64xi32>
    %106 = arith.cmpi sle, %4, %105 : vector<1x64xi32>
    %cst_31 = arith.constant 0.000000e+00 : f32
    %107 = vector.broadcast %cst_31 : f32 to vector<2x64xf32>
    %108 = vector.shape_cast %106 : vector<1x64xi1> to vector<1x64xi1>
    %109 = vector.broadcast %108 : vector<1x64xi1> to vector<2x64xi1>
    %110 = arith.select %109, %104, %107 : vector<2x64xi1>, vector<2x64xf32>
    %111 = vector.extract_strided_slice %51 {offsets = [0, 18], sizes = [2, 64], strides = [1, 1]} : vector<2x82xf32> to vector<2x64xf32>
    %c6_i32_32 = arith.constant 6 : i32
    %112 = vector.broadcast %c6_i32_32 : i32 to vector<1x64xi32>
    %113 = arith.cmpi sle, %4, %112 : vector<1x64xi32>
    %c6_i32_33 = arith.constant 6 : i32
    %114 = vector.broadcast %c6_i32_33 : i32 to vector<1x64xi32>
    %115 = arith.cmpi sle, %6, %114 : vector<1x64xi32>
    %116 = arith.andi %113, %115 : vector<1x64xi1>
    %cst_34 = arith.constant 0.000000e+00 : f32
    %117 = vector.broadcast %cst_34 : f32 to vector<2x64xf32>
    %118 = vector.shape_cast %116 : vector<1x64xi1> to vector<1x64xi1>
    %119 = vector.broadcast %118 : vector<1x64xi1> to vector<2x64xi1>
    %120 = arith.select %119, %111, %117 : vector<2x64xi1>, vector<2x64xf32>
    %121 = tpu.concatenate %61, %68, %78, %85, %86, %93, %103, %110, %120 in 0 : vector<2x64xf32>, vector<2x64xf32>, vector<2x64xf32>, vector<2x64xf32>, vector<2x64xf32>, vector<2x64xf32>, vector<2x64xf32>, vector<2x64xf32>, vector<2x64xf32> -> vector<18x64xf32>
    %c0_35 = arith.constant 0 : index
    %c0_36 = arith.constant 0 : index
    %122 = vector.load %arg3[%c0_35, %c0_36] : memref<2x18xbf16, #tpu.memory_space<vmem>>, vector<2x18xbf16>
    %123 = arith.truncf %121 : vector<18x64xf32> to vector<18x64xbf16>
    %cst_37 = arith.constant dense<0.000000e+00> : vector<2x64xf32>
    %124 = tpu.matmul %122, %123, %cst_37 {dimension_numbers = #tpu.dot_dimension_numbers<[1], [0], [0], [1], [0, 0, 1, 1], [], []>} : vector<2x18xbf16>, vector<18x64xbf16>, vector<2x64xf32> -> vector<2x64xf32>
    %c0_38 = arith.constant 0 : index
    %c0_39 = arith.constant 0 : index
    %125 = vector.load %arg7[%c0_38, %c0_39] : memref<2x1xf32, #tpu.memory_space<vmem>>, vector<2x1xf32>
    %126 = vector.broadcast %125 : vector<2x1xf32> to vector<2x64xf32>
    %127 = arith.mulf %124, %126 : vector<2x64xf32>
    %c0_40 = arith.constant 0 : index
    %c0_41 = arith.constant 0 : index
    %128 = vector.load %arg8[%c0_40, %c0_41] : memref<2x1xf32, #tpu.memory_space<vmem>>, vector<2x1xf32>
    %129 = vector.broadcast %128 : vector<2x1xf32> to vector<2x64xf32>
    %130 = arith.addf %127, %129 : vector<2x64xf32>
    %cst_42 = arith.constant 0.000000e+00 : f32
    %131 = vector.broadcast %cst_42 : f32 to vector<2x64xf32>
    %132 = arith.cmpf oge, %130, %131 : vector<2x64xf32>
    %cst_43 = arith.constant 2.500000e-01 : f32
    %133 = vector.broadcast %cst_43 : f32 to vector<2x64xf32>
    %134 = arith.mulf %133, %130 : vector<2x64xf32>
    %135 = arith.select %132, %130, %134 : vector<2x64xi1>, vector<2x64xf32>
    %c0_44 = arith.constant 0 : index
    %c0_45 = arith.constant 0 : index
    %136 = vector.load %arg4[%c0_44, %c0_45] : memref<16x2xbf16, #tpu.memory_space<vmem>>, vector<16x2xbf16>
    %137 = arith.truncf %135 : vector<2x64xf32> to vector<2x64xbf16>
    %cst_46 = arith.constant dense<0.000000e+00> : vector<16x64xf32>
    %138 = tpu.matmul %136, %137, %cst_46 {dimension_numbers = #tpu.dot_dimension_numbers<[1], [0], [0], [1], [0, 0, 1, 1], [], []>} : vector<16x2xbf16>, vector<2x64xbf16>, vector<16x64xf32> -> vector<16x64xf32>
    %c0_47 = arith.constant 0 : index
    %c0_48 = arith.constant 0 : index
    %139 = vector.load %arg9[%c0_47, %c0_48] : memref<16x1xf32, #tpu.memory_space<vmem>>, vector<16x1xf32>
    %140 = vector.broadcast %139 : vector<16x1xf32> to vector<16x64xf32>
    %141 = arith.mulf %138, %140 : vector<16x64xf32>
    %c0_49 = arith.constant 0 : index
    %c0_50 = arith.constant 0 : index
    %142 = vector.load %arg10[%c0_49, %c0_50] : memref<16x1xf32, #tpu.memory_space<vmem>>, vector<16x1xf32>
    %143 = vector.broadcast %142 : vector<16x1xf32> to vector<16x64xf32>
    %144 = arith.addf %141, %143 : vector<16x64xf32>
    %cst_51 = arith.constant 0.000000e+00 : f32
    %145 = vector.broadcast %cst_51 : f32 to vector<16x64xf32>
    %146 = arith.cmpf oge, %144, %145 : vector<16x64xf32>
    %cst_52 = arith.constant 2.500000e-01 : f32
    %147 = vector.broadcast %cst_52 : f32 to vector<16x64xf32>
    %148 = arith.mulf %147, %144 : vector<16x64xf32>
    %149 = arith.select %146, %144, %148 : vector<16x64xi1>, vector<16x64xf32>
    %cst_53 = arith.constant 0.000000e+00 : f32
    %150 = vector.broadcast %cst_53 : f32 to vector<8x64xf32>
    %151 = tpu.concatenate %21, %150 in 0 : vector<8x64xf32>, vector<8x64xf32> -> vector<16x64xf32>
    %152 = arith.addf %151, %149 : vector<16x64xf32>
    %cst_54 = arith.constant 0.000000e+00 : f32
    %153 = vector.broadcast %cst_54 : f32 to vector<16x64xf32>
    %154 = arith.cmpf oge, %152, %153 : vector<16x64xf32>
    %cst_55 = arith.constant 2.500000e-01 : f32
    %155 = vector.broadcast %cst_55 : f32 to vector<16x64xf32>
    %156 = arith.mulf %155, %152 : vector<16x64xf32>
    %157 = arith.select %154, %152, %156 : vector<16x64xi1>, vector<16x64xf32>
    %c0_56 = arith.constant 0 : index
    %c0_57 = arith.constant 0 : index
    %c0_58 = arith.constant 0 : index
    %158 = vector.load %arg11[%c0_56, %c0_57, %c0_58] : memref<1x16x64xf32, #tpu.memory_space<vmem>>, vector<1x16x64xf32>
    %159 = vector.shape_cast %158 : vector<1x16x64xf32> to vector<16x64xf32>
    %160 = vector.shape_cast %157 : vector<16x64xf32> to vector<1x16x64xf32>
    tpu.vector_store %arg11[%c0_56, %c0_57, %c0_58], %160 {strides = array<i32>} : memref<1x16x64xf32, #tpu.memory_space<vmem>>, vector<1x16x64xf32>,
    return
  }
  func.func @transform_0(%arg0: i32) -> (i32, i32, i32) {
    %c0_i32 = arith.constant 0 : i32
    %c0_i32_0 = arith.constant 0 : i32
    %c0_i32_1 = arith.constant 0 : i32
    return %arg0, %c0_i32, %c0_i32_0 : i32, i32, i32
  }
  func.func @transform_1(%arg0: i32) -> (i32, i32) {
    %c0_i32 = arith.constant 0 : i32
    %c0_i32_0 = arith.constant 0 : i32
    %c0_i32_1 = arith.constant 0 : i32
    return %c0_i32, %c0_i32_0 : i32, i32
  }
  func.func @transform_2(%arg0: i32) -> (i32, i32) {
    %c0_i32 = arith.constant 0 : i32
    %c0_i32_0 = arith.constant 0 : i32
    %c0_i32_1 = arith.constant 0 : i32
    return %c0_i32, %c0_i32_0 : i32, i32
  }
  func.func @transform_3(%arg0: i32) -> (i32, i32) {
    %c0_i32 = arith.constant 0 : i32
    %c0_i32_0 = arith.constant 0 : i32
    %c0_i32_1 = arith.constant 0 : i32
    return %c0_i32, %c0_i32_0 : i32, i32
  }
  func.func @transform_4(%arg0: i32) -> (i32, i32) {
    %c0_i32 = arith.constant 0 : i32
    %c0_i32_0 = arith.constant 0 : i32
    %c0_i32_1 = arith.constant 0 : i32
    return %c0_i32, %c0_i32_0 : i32, i32
  }
  func.func @transform_5(%arg0: i32) -> (i32, i32) {
    %c0_i32 = arith.constant 0 : i32
    %c0_i32_0 = arith.constant 0 : i32
    %c0_i32_1 = arith.constant 0 : i32
    return %c0_i32, %c0_i32_0 : i32, i32
  }
  func.func @transform_6(%arg0: i32) -> (i32, i32) {
    %c0_i32 = arith.constant 0 : i32
    %c0_i32_0 = arith.constant 0 : i32
    %c0_i32_1 = arith.constant 0 : i32
    return %c0_i32, %c0_i32_0 : i32, i32
  }
  func.func @transform_7(%arg0: i32) -> (i32, i32) {
    %c0_i32 = arith.constant 0 : i32
    %c0_i32_0 = arith.constant 0 : i32
    %c0_i32_1 = arith.constant 0 : i32
    return %c0_i32, %c0_i32_0 : i32, i32
  }
  func.func @transform_8(%arg0: i32) -> (i32, i32) {
    %c0_i32 = arith.constant 0 : i32
    %c0_i32_0 = arith.constant 0 : i32
    %c0_i32_1 = arith.constant 0 : i32
    return %c0_i32, %c0_i32_0 : i32, i32
  }
  func.func @transform_9(%arg0: i32) -> (i32, i32) {
    %c0_i32 = arith.constant 0 : i32
    %c0_i32_0 = arith.constant 0 : i32
    %c0_i32_1 = arith.constant 0 : i32
    return %c0_i32, %c0_i32_0 : i32, i32
  }
  func.func @transform_10(%arg0: i32) -> (i32, i32, i32) {
    %c0_i32 = arith.constant 0 : i32
    %c0_i32_0 = arith.constant 0 : i32
    %c0_i32_1 = arith.constant 0 : i32
    return %arg0, %c0_i32, %c0_i32_0 : i32, i32, i32
  }
  func.func @transform_11(%arg0: i32) -> (i32, i32, i32) {
    %c0_i32 = arith.constant 0 : i32
    %c0_i32_0 = arith.constant 0 : i32
    %c0_i32_1 = arith.constant 0 : i32
    return %arg0, %c0_i32, %c0_i32_0 : i32, i32, i32
  }
}

</mosaic_0001>

<llo_original>
// kernel: tpu_custom_call.1
$region0: #{tpu_custom_call.1}
  #allocation0 [shape = 'u32[]', space=smem, size = 0x4, offset = 0x4, fixed_abs, tag = 'smem constant byte address 0x4 - core index']
  #allocation1 [shape = 'u32[144,128]{1,0:T(1,128)}', space=vmem, size = 0x12000, scoped, tag = 'internal scratch']
  %s0 = inlined_call_operand.hbm [shape: f32[2,32,64], index: 0, kind: input, shape index: {}]
  %s1 = inlined_call_operand.vmem [shape: bf16[2,32], index: 1, kind: input, shape index: {}]
  %s2 = inlined_call_operand.vmem [shape: bf16[2,18], index: 2, kind: input, shape index: {}]
  %s3 = inlined_call_operand.vmem [shape: bf16[16,2], index: 3, kind: input, shape index: {}]
  %s4 = inlined_call_operand.vmem [shape: f32[2,1], index: 4, kind: input, shape index: {}]
  %s5 = inlined_call_operand.vmem [shape: f32[2,1], index: 5, kind: input, shape index: {}]
  %s6 = inlined_call_operand.vmem [shape: f32[2,1], index: 6, kind: input, shape index: {}]
  %s7 = inlined_call_operand.vmem [shape: f32[2,1], index: 7, kind: input, shape index: {}]
  %s8 = inlined_call_operand.vmem [shape: f32[16,1], index: 8, kind: input, shape index: {}]
  %s9 = inlined_call_operand.vmem [shape: f32[16,1], index: 9, kind: input, shape index: {}]
  %s10 = inlined_call_operand.hbm [shape: f32[2,16,64], index: 10, kind: output, shape index: {0}]
  %s11 = inlined_call_operand.hbm [shape: s32[2,8,64], index: 11, kind: output, shape index: {1}]
  %12 = xla_tuple %s10, %s11
  %s13 = sld [smem:[#allocation0]]
  $region85: #{tpu_custom_call.1} parent=0
    _
  %s15 = ssub.s32 1, %s13
  %s16 = scalar_select 0, %s15, %s13
  $region1: #{tpu_custom_call.1} parent=0
    #allocation2 [shape = 'u8[32768]{0}', space=vmem, size = 0x8000, scoped, tag = 'input window, operand 0']
    #allocation3 [shape = 's32[2]{0}', space=sflag, size = 0x8, scoped, tag = 'scoped memory for tpu_custom_call.1']
    #allocation4 [shape = 's32[2]{0}', space=sflag, size = 0x8, scoped, tag = 'scoped memory for tpu_custom_call.1']
    #allocation5 [shape = 'u8[16384]{0}', space=vmem, size = 0x4000, scoped, tag = 'output window, operand 0']
    #allocation6 [shape = 'u8[8192]{0}', space=vmem, size = 0x2000, scoped, tag = 'output window, operand 1']
    #allocation7 [shape = 's32[2]{0}', space=sflag, size = 0x8, scoped, tag = 'scoped memory for tpu_custom_call.1']
    %17 = vsyncpa [#allocation3], 0
    %s18 = scalar_lea.sflag [#allocation3], 1
    %19 = vsyncpa %s18, 0
    %20 = vsyncpa [#allocation4], 0
    %s21 = scalar_lea.sflag [#allocation4], 1
    %22 = vsyncpa %s21, 0
    %23 = vsyncpa [#allocation7], 0
    %s24 = scalar_lea.sflag [#allocation7], 1
    %25 = vsyncpa %s24, 0
    loop: start=0, step=1, limit=4
    $region2: #{tpu_custom_call.1} parent=1 // loop_pre_header
      _
    $region3: #{tpu_custom_call.1} parent=1 // loop_header
      %s27 = sphi 0, %s31
      %p28 = scmp.ge.s32.totalorder %s27, 4
      %s37 = sphi 0, %s39
      %s40 = sphi 0, %s37
      %s41 = sphi 0, %s40
      %s57 = sphi 0, %s41
      %s61 = sphi 0, %s61
      %s63 = sphi 0, %s61
      %s64 = sphi 0, %s63
      %s78 = sphi 0, %s64
      %s82 = sphi 0, %s82
      %s84 = sphi 0, %s82
      %s85 = sphi 0, %s84
      %s99 = sphi 0, %s85
      %s103 = sphi 0, %s103
      %s105 = sphi 0, %s103
      %s106 = sphi 0, %s105
      %s120 = sphi 0, %s106
      %s124 = sphi 0, %s124
      %s126 = sphi 0, %s124
      %s127 = sphi 0, %s126
      %s141 = sphi 0, %s127
      %s145 = sphi 0, %s145
      %s147 = sphi 0, %s145
      %s148 = sphi 0, %s147
      %s162 = sphi 0, %s148
      %s166 = sphi 0, %s166
      %s168 = sphi 0, %s166
      %s169 = sphi 0, %s168
      %s183 = sphi 0, %s169
      %s187 = sphi 0, %s187
      %s189 = sphi 0, %s187
      %s190 = sphi 0, %s189
      %s204 = sphi 0, %s190
      %s208 = sphi 0, %s208
      %s210 = sphi 0, %s208
      %s211 = sphi 0, %s210
      %s225 = sphi 0, %s211
      %s229 = sphi 0, %s229
      %s231 = sphi 0, %s229
      %s232 = sphi 0, %s231
      %s246 = sphi 0, %s232
      %s252 = sphi 0, %s254
      %s255 = sphi 0, %s252
      %s256 = sphi 0, %s255
      %s272 = sphi 0, %s256
      %s278 = sphi 0, %s280
      %s281 = sphi 0, %s278
      %s282 = sphi 0, %s281
      %s298 = sphi 0, %s282
    $region4: #{tpu_custom_call.1} parent=1 // loop_header_branch
      %30 = sbr.rel (%p28) target = $region8
    $region5: #{tpu_custom_call.1} parent=1 // loop_body
      %s32 = ssub.s32 %s27, 1
      %s33 = ssub.s32 %s27, 2
      %s34 = sadd.s32 %s27, 1
      %s35 = ssub.s32 %s27, %s34
      %p36 = scmp.eq.s32.totalorder %s35, 0
      %s38 = sadd.s32 %s37, 1
      %s39 = scalar_select %p36, %s37, %s38
      %p42 = pneg %p36
      %p43 = scmp.eq.s32.totalorder %s27, 1
      %p44 = por %p42, %p43
      %p45 = scmp.ne.s32.totalorder %s37, %s40
      %p46 = scmp.eq.s32.totalorder %s27, 0
      %p47 = por %p45, %p46
      %p48 = scmp.ne.s32.totalorder %s37, %s40
      %p49 = scmp.eq.s32.totalorder %s32, 1
      %p50 = por %p48, %p49
      %p51 = scmp.ne.s32.totalorder %s40, %s41
      %p52 = scmp.eq.s32.totalorder %s32, 0
      %p53 = por %p51, %p52
      %p54 = scmp.ne.s32.totalorder %s40, %s41
      %p55 = scmp.eq.s32.totalorder %s33, 1
      %p56 = por %p54, %p55
      %p58 = scmp.ne.s32.totalorder %s41, %s57
      %p59 = scmp.eq.s32.totalorder %s33, 0
      %p60 = por %p58, %p59
      %s62 = sadd.s32 %s61, 1
      %p65 = scmp.eq.s32.totalorder %s27, 1
      %p66 = scmp.ne.s32.totalorder %s61, %s63
      %p67 = scmp.eq.s32.totalorder %s27, 0
      %p68 = por %p66, %p67
      %p69 = scmp.ne.s32.totalorder %s61, %s63
      %p70 = scmp.eq.s32.totalorder %s32, 1
      %p71 = por %p69, %p70
      %p72 = scmp.ne.s32.totalorder %s63, %s64
      %p73 = scmp.eq.s32.totalorder %s32, 0
      %p74 = por %p72, %p73
      %p75 = scmp.ne.s32.totalorder %s63, %s64
      %p76 = scmp.eq.s32.totalorder %s33, 1
      %p77 = por %p75, %p76
      %p79 = scmp.ne.s32.totalorder %s64, %s78
      %p80 = scmp.eq.s32.totalorder %s33, 0
      %p81 = por %p79, %p80
      %s83 = sadd.s32 %s82, 1
      %p86 = scmp.eq.s32.totalorder %s27, 1
      %p87 = scmp.ne.s32.totalorder %s82, %s84
      %p88 = scmp.eq.s32.totalorder %s27, 0
      %p89 = por %p87, %p88
      %p90 = scmp.ne.s32.totalorder %s82, %s84
      %p91 = scmp.eq.s32.totalorder %s32, 1
      %p92 = por %p90, %p91
      %p93 = scmp.ne.s32.totalorder %s84, %s85
      %p94 = scmp.eq.s32.totalorder %s32, 0
      %p95 = por %p93, %p94
      %p96 = scmp.ne.s32.totalorder %s84, %s85
      %p97 = scmp.eq.s32.totalorder %s33, 1
      %p98 = por %p96, %p97
      %p100 = scmp.ne.s32.totalorder %s85, %s99
      %p101 = scmp.eq.s32.totalorder %s33, 0
      %p102 = por %p100, %p101
      %s104 = sadd.s32 %s103, 1
      %p107 = scmp.eq.s32.totalorder %s27, 1
      %p108 = scmp.ne.s32.totalorder %s103, %s105
      %p109 = scmp.eq.s32.totalorder %s27, 0
      %p110 = por %p108, %p109
      %p111 = scmp.ne.s32.totalorder %s103, %s105
      %p112 = scmp.eq.s32.totalorder %s32, 1
      %p113 = por %p111, %p112
      %p114 = scmp.ne.s32.totalorder %s105, %s106
      %p115 = scmp.eq.s32.totalorder %s32, 0
      %p116 = por %p114, %p115
      %p117 = scmp.ne.s32.totalorder %s105, %s106
      %p118 = scmp.eq.s32.totalorder %s33, 1
      %p119 = por %p117, %p118
      %p121 = scmp.ne.s32.totalorder %s106, %s120
      %p122 = scmp.eq.s32.totalorder %s33, 0
      %p123 = por %p121, %p122
      %s125 = sadd.s32 %s124, 1
      %p128 = scmp.eq.s32.totalorder %s27, 1
      %p129 = scmp.ne.s32.totalorder %s124, %s126
      %p130 = scmp.eq.s32.totalorder %s27, 0
      %p131 = por %p129, %p130
      %p132 = scmp.ne.s32.totalorder %s124, %s126
      %p133 = scmp.eq.s32.totalorder %s32, 1
      %p134 = por %p132, %p133
      %p135 = scmp.ne.s32.totalorder %s126, %s127
      %p136 = scmp.eq.s32.totalorder %s32, 0
      %p137 = por %p135, %p136
      %p138 = scmp.ne.s32.totalorder %s126, %s127
      %p139 = scmp.eq.s32.totalorder %s33, 1
      %p140 = por %p138, %p139
      %p142 = scmp.ne.s32.totalorder %s127, %s141
      %p143 = scmp.eq.s32.totalorder %s33, 0
      %p144 = por %p142, %p143
      %s146 = sadd.s32 %s145, 1
      %p149 = scmp.eq.s32.totalorder %s27, 1
      %p150 = scmp.ne.s32.totalorder %s145, %s147
      %p151 = scmp.eq.s32.totalorder %s27, 0
      %p152 = por %p150, %p151
      %p153 = scmp.ne.s32.totalorder %s145, %s147
      %p154 = scmp.eq.s32.totalorder %s32, 1
      %p155 = por %p153, %p154
      %p156 = scmp.ne.s32.totalorder %s147, %s148
      %p157 = scmp.eq.s32.totalorder %s32, 0
      %p158 = por %p156, %p157
      %p159 = scmp.ne.s32.totalorder %s147, %s148
      %p160 = scmp.eq.s32.totalorder %s33, 1
      %p161 = por %p159, %p160
      %p163 = scmp.ne.s32.totalorder %s148, %s162
      %p164 = scmp.eq.s32.totalorder %s33, 0
      %p165 = por %p163, %p164
      %s167 = sadd.s32 %s166, 1
      %p170 = scmp.eq.s32.totalorder %s27, 1
      %p171 = scmp.ne.s32.totalorder %s166, %s168
      %p172 = scmp.eq.s32.totalorder %s27, 0
      %p173 = por %p171, %p172
      %p174 = scmp.ne.s32.totalorder %s166, %s168
      %p175 = scmp.eq.s32.totalorder %s32, 1
      %p176 = por %p174, %p175
      %p177 = scmp.ne.s32.totalorder %s168, %s169
      %p178 = scmp.eq.s32.totalorder %s32, 0
      %p179 = por %p177, %p178
      %p180 = scmp.ne.s32.totalorder %s168, %s169
      %p181 = scmp.eq.s32.totalorder %s33, 1
      %p182 = por %p180, %p181
      %p184 = scmp.ne.s32.totalorder %s169, %s183
      %p185 = scmp.eq.s32.totalorder %s33, 0
      %p186 = por %p184, %p185
      %s188 = sadd.s32 %s187, 1
      %p191 = scmp.eq.s32.totalorder %s27, 1
      %p192 = scmp.ne.s32.totalorder %s187, %s189
      %p193 = scmp.eq.s32.totalorder %s27, 0
      %p194 = por %p192, %p193
      %p195 = scmp.ne.s32.totalorder %s187, %s189
      %p196 = scmp.eq.s32.totalorder %s32, 1
      %p197 = por %p195, %p196
      %p198 = scmp.ne.s32.totalorder %s189, %s190
      %p199 = scmp.eq.s32.totalorder %s32, 0
      %p200 = por %p198, %p199
      %p201 = scmp.ne.s32.totalorder %s189, %s190
      %p202 = scmp.eq.s32.totalorder %s33, 1
      %p203 = por %p201, %p202
      %p205 = scmp.ne.s32.totalorder %s190, %s204
      %p206 = scmp.eq.s32.totalorder %s33, 0
      %p207 = por %p205, %p206
      %s209 = sadd.s32 %s208, 1
      %p212 = scmp.eq.s32.totalorder %s27, 1
      %p213 = scmp.ne.s32.totalorder %s208, %s210
      %p214 = scmp.eq.s32.totalorder %s27, 0
      %p215 = por %p213, %p214
      %p216 = scmp.ne.s32.totalorder %s208, %s210
      %p217 = scmp.eq.s32.totalorder %s32, 1
      %p218 = por %p216, %p217
      %p219 = scmp.ne.s32.totalorder %s210, %s211
      %p220 = scmp.eq.s32.totalorder %s32, 0
      %p221 = por %p219, %p220
      %p222 = scmp.ne.s32.totalorder %s210, %s211
      %p223 = scmp.eq.s32.totalorder %s33, 1
      %p224 = por %p222, %p223
      %p226 = scmp.ne.s32.totalorder %s211, %s225
      %p227 = scmp.eq.s32.totalorder %s33, 0
      %p228 = por %p226, %p227
      %s230 = sadd.s32 %s229, 1
      %p233 = scmp.eq.s32.totalorder %s27, 1
      %p234 = scmp.ne.s32.totalorder %s229, %s231
      %p235 = scmp.eq.s32.totalorder %s27, 0
      %p236 = por %p234, %p235
      %p237 = scmp.ne.s32.totalorder %s229, %s231
      %p238 = scmp.eq.s32.totalorder %s32, 1
      %p239 = por %p237, %p238
      %p240 = scmp.ne.s32.totalorder %s231, %s232
      %p241 = scmp.eq.s32.totalorder %s32, 0
      %p242 = por %p240, %p241
      %p243 = scmp.ne.s32.totalorder %s231, %s232
      %p244 = scmp.eq.s32.totalorder %s33, 1
      %p245 = por %p243, %p244
      %p247 = scmp.ne.s32.totalorder %s232, %s246
      %p248 = scmp.eq.s32.totalorder %s33, 0
      %p249 = por %p247, %p248
      %s250 = ssub.s32 %s27, %s34
      %p251 = scmp.eq.s32.totalorder %s250, 0
      %s253 = sadd.s32 %s252, 1
      %s254 = scalar_select %p251, %s252, %s253
      %p257 = pneg %p251
      %p258 = scmp.eq.s32.totalorder %s27, 1
      %p259 = por %p257, %p258
      %p260 = scmp.ne.s32.totalorder %s252, %s255
      %p261 = scmp.eq.s32.totalorder %s27, 0
      %p262 = por %p260, %p261
      %p263 = scmp.ne.s32.totalorder %s252, %s255
      %p264 = scmp.eq.s32.totalorder %s32, 1
      %p265 = por %p263, %p264
      %p266 = scmp.ne.s32.totalorder %s255, %s256
      %p267 = scmp.eq.s32.totalorder %s32, 0
      %p268 = por %p266, %p267
      %p269 = scmp.ne.s32.totalorder %s255, %s256
      %p270 = scmp.eq.s32.totalorder %s33, 1
      %p271 = por %p269, %p270
      %p273 = scmp.ne.s32.totalorder %s256, %s272
      %p274 = scmp.eq.s32.totalorder %s33, 0
      %p275 = por %p273, %p274
      %s276 = ssub.s32 %s27, %s34
      %p277 = scmp.eq.s32.totalorder %s276, 0
      %s279 = sadd.s32 %s278, 1
      %s280 = scalar_select %p277, %s278, %s279
      %p283 = pneg %p277
      %p284 = scmp.eq.s32.totalorder %s27, 1
      %p285 = por %p283, %p284
      %p286 = scmp.ne.s32.totalorder %s278, %s281
      %p287 = scmp.eq.s32.totalorder %s27, 0
      %p288 = por %p286, %p287
      %p289 = scmp.ne.s32.totalorder %s278, %s281
      %p290 = scmp.eq.s32.totalorder %s32, 1
      %p291 = por %p289, %p290
      %p292 = scmp.ne.s32.totalorder %s281, %s282
      %p293 = scmp.eq.s32.totalorder %s32, 0
      %p294 = por %p292, %p293
      %p295 = scmp.ne.s32.totalorder %s281, %s282
      %p296 = scmp.eq.s32.totalorder %s33, 1
      %p297 = por %p295, %p296
      %p299 = scmp.ne.s32.totalorder %s282, %s298
      %p300 = scmp.eq.s32.totalorder %s33, 0
      %p301 = por %p299, %p300
      %p302 = scmp.le.s32.totalorder 1, %s27
      %p303 = scmp.lt.s32.totalorder %s27, 3
      %p304 = pnand %p302, %p303
      %p305 = pneg %p304
      // Predicated region
      $region9: #{tpu_custom_call.1} parent=5 // pred_check
        _
      $region10: #{tpu_custom_call.1} parent=5 // pred_check_branch
        %307 = sbr.rel (%p304) target = $region12
      $region11: #{tpu_custom_call.1} parent=5 // pred_region
        %s308 = ssub.s32 %s27, 1
        // Predicated region
        $region13: #{tpu_custom_call.1} parent=11 // pred_check
          %p309 = pneg %p74
        $region14: #{tpu_custom_call.1} parent=11 // pred_check_branch
          %311 = sbr.rel (%p309) target = $region16
        $region15: #{tpu_custom_call.1} parent=11 // pred_region
          _
        $region16: #{tpu_custom_call.1} parent=11 // pred_fallthru
          _
        // Predicated region
        $region17: #{tpu_custom_call.1} parent=11 // pred_check
          %p312 = pneg %p95
        $region18: #{tpu_custom_call.1} parent=11 // pred_check_branch
          %314 = sbr.rel (%p312) target = $region20
        $region19: #{tpu_custom_call.1} parent=11 // pred_region
          _
        $region20: #{tpu_custom_call.1} parent=11 // pred_fallthru
          _
        // Predicated region
        $region21: #{tpu_custom_call.1} parent=11 // pred_check
          %p315 = pneg %p116
        $region22: #{tpu_custom_call.1} parent=11 // pred_check_branch
          %317 = sbr.rel (%p315) target = $region24
        $region23: #{tpu_custom_call.1} parent=11 // pred_region
          _
        $region24: #{tpu_custom_call.1} parent=11 // pred_fallthru
          _
        // Predicated region
        $region25: #{tpu_custom_call.1} parent=11 // pred_check
          %p318 = pneg %p137
        $region26: #{tpu_custom_call.1} parent=11 // pred_check_branch
          %320 = sbr.rel (%p318) target = $region28
        $region27: #{tpu_custom_call.1} parent=11 // pred_region
          _
        $region28: #{tpu_custom_call.1} parent=11 // pred_fallthru
          _
        // Predicated region
        $region29: #{tpu_custom_call.1} parent=11 // pred_check
          %p321 = pneg %p158
        $region30: #{tpu_custom_call.1} parent=11 // pred_check_branch
          %323 = sbr.rel (%p321) target = $region32
        $region31: #{tpu_custom_call.1} parent=11 // pred_region
          _
        $region32: #{tpu_custom_call.1} parent=11 // pred_fallthru
          _
        // Predicated region
        $region33: #{tpu_custom_call.1} parent=11 // pred_check
          %p324 = pneg %p179
        $region34: #{tpu_custom_call.1} parent=11 // pred_check_branch
          %326 = sbr.rel (%p324) target = $region36
        $region35: #{tpu_custom_call.1} parent=11 // pred_region
          _
        $region36: #{tpu_custom_call.1} parent=11 // pred_fallthru
          _
        // Predicated region
        $region37: #{tpu_custom_call.1} parent=11 // pred_check
          %p327 = pneg %p200
        $region38: #{tpu_custom_call.1} parent=11 // pred_check_branch
          %329 = sbr.rel (%p327) target = $region40
        $region39: #{tpu_custom_call.1} parent=11 // pred_region
          _
        $region40: #{tpu_custom_call.1} parent=11 // pred_fallthru
          _
        // Predicated region
        $region41: #{tpu_custom_call.1} parent=11 // pred_check
          %p330 = pneg %p221
        $region42: #{tpu_custom_call.1} parent=11 // pred_check_branch
          %332 = sbr.rel (%p330) target = $region44
        $region43: #{tpu_custom_call.1} parent=11 // pred_region
          _
        $region44: #{tpu_custom_call.1} parent=11 // pred_fallthru
          _
        // Predicated region
        $region45: #{tpu_custom_call.1} parent=11 // pred_check
          %p333 = pneg %p242
        $region46: #{tpu_custom_call.1} parent=11 // pred_check_branch
          %335 = sbr.rel (%p333) target = $region48
        $region47: #{tpu_custom_call.1} parent=11 // pred_region
          _
        $region48: #{tpu_custom_call.1} parent=11 // pred_fallthru
          _
      $region12: #{tpu_custom_call.1} parent=5 // pred_fallthru
        _
      %p336 = scmp.lt.s32.totalorder %s27, 2
      // Predicated region
      $region49: #{tpu_custom_call.1} parent=5 // pred_check
        %p337 = pneg %p336
      $region50: #{tpu_custom_call.1} parent=5 // pred_check_branch
        %339 = sbr.rel (%p337) target = $region52
      $region51: #{tpu_custom_call.1} parent=5 // pred_region
        // Predicated region
        $region53: #{tpu_custom_call.1} parent=51 // pred_check
          %p340 = pneg %p47
        $region54: #{tpu_custom_call.1} parent=51 // pred_check_branch
          %342 = sbr.rel (%p340) target = $region56
        $region55: #{tpu_custom_call.1} parent=51 // pred_region
          %s343 = sand.u32 %s37, 1
          %s344 = scalar_lea.sflag [#allocation3], %s343
          %s345 = sand.u32 %s37, 1
          %s346 = smul.addr %s345, 32
          %s347 = scalar_lea.vmem [#allocation2], %s346
          %s349 = ssub.s32 512, 512
          %350 = vsyncadd %s344, %s349
          %s351 = smul.addr %s27, 4
          %s352 = smul.addr %s351, 128
          %s353 = scalar_lea.hbm %s0, %s352
          %s354 = sshll.u32 %s347, 4
          %s355 = int_to_ptr.vmem [resolvable:$true] %s354
          %360 = dma.hbm_to_vmem [thread:$0]  %s353, 512, %s355, %s344, 128, 128, 8
        $region56: #{tpu_custom_call.1} parent=51 // pred_fallthru
          _
      $region52: #{tpu_custom_call.1} parent=5 // pred_fallthru
        _
      %p361 = scmp.le.s32.totalorder 1, %s27
      %p362 = scmp.lt.s32.totalorder %s27, 3
      %p363 = pnand %p361, %p362
      %p364 = pneg %p363
      // Predicated region
      $region57: #{tpu_custom_call.1} parent=5 // pred_check
        _
      $region58: #{tpu_custom_call.1} parent=5 // pred_check_branch
        %366 = sbr.rel (%p363) target = $region60
      $region59: #{tpu_custom_call.1} parent=5 // pred_region
        %s367 = ssub.s32 %s27, 1
        %s368 = sand.u32 %s40, 1
        %s369 = scalar_lea.sflag [#allocation3], %s368
        %s370 = sand.u32 %s40, 1
        %s371 = smul.addr %s370, 32
        %s372 = scalar_lea.vmem [#allocation2], %s371
        // Predicated region
        $region61: #{tpu_custom_call.1} parent=59 // pred_check
          %p373 = pneg %p53
        $region62: #{tpu_custom_call.1} parent=59 // pred_check_branch
          %375 = sbr.rel (%p373) target = $region64
        $region63: #{tpu_custom_call.1} parent=59 // pred_region
          %376 = dma.done %s369, 512
        $region64: #{tpu_custom_call.1} parent=59 // pred_fallthru
          _
        %s377 = sand.u32 %s40, 1
        %s378 = scalar_lea.sflag [#allocation3], %s377
        %s379 = sand.u32 %s40, 1
        %s380 = smul.addr %s379, 32
        %s381 = scalar_lea.vmem [#allocation2], %s380
        %p382 = pneg %p53
        %p383 = pneg %p50
        %p384 = pneg %p74
        %p385 = pneg %p71
        %p386 = pneg %p95
        %p387 = pneg %p92
        %p388 = pneg %p116
        %p389 = pneg %p113
        %p390 = pneg %p137
        %p391 = pneg %p134
        %p392 = pneg %p158
        %p393 = pneg %p155
        %p394 = pneg %p179
        %p395 = pneg %p176
        %p396 = pneg %p200
        %p397 = pneg %p197
        %p398 = pneg %p221
        %p399 = pneg %p218
        %p400 = pneg %p242
        %p401 = pneg %p239
        %p402 = pneg %p268
        %p403 = pneg %p265
        %s404 = sand.u32 %s255, 1
        %s405 = scalar_lea.sflag [#allocation4], %s404
        %s406 = sand.u32 %s255, 1
        %s407 = smul.addr %s406, 16
        %s408 = scalar_lea.vmem [#allocation5], %s407
        %p409 = pneg %p294
        %p410 = pneg %p291
        %s411 = sand.u32 %s281, 1
        %s412 = scalar_lea.sflag [#allocation7], %s411
        %s413 = sand.u32 %s281, 1
        %s414 = smul.addr %s413, 8
        %s415 = scalar_lea.vmem [#allocation6], %s414
        %v417 = vld [vmem:[%s372] sm:$0xff]
        %v418 = vld [vmem:[%s372 + $0x8] sm:$0xff]
        %v419 = vld [vmem:[%s372 + $0x10] sm:$0xff]
        %v420 = vld [vmem:[%s372 + $0x18] sm:$0xff]
        %v421 = vlaneseq
        %v422 = vand.u32 %v421, 127
        %v423 = vshra.s32 %v422, 3
        %v424 = vand.u32 %v422, 7
        %vm425 = vcmp.gt.f32.partialorder %v418, %v417
        %v426 = vsel %vm425, %v418, %v417
        %v427 = vsel %vm425, 1, 0
        %vm428 = vcmp.gt.f32.partialorder %v419, %v426
        %v429 = vsel %vm428, %v419, %v426
        %v430 = vsel %vm428, 16, %v427
        %vm431 = vcmp.gt.f32.partialorder %v420, %v429
        %v432 = vsel %vm431, %v420, %v429
        %v433 = vsel %vm431, 17, %v430
        %v434 = vmul.u32 %v423, 2
        %v435 = vmul.u32 %v434, 16
        %v436 = vmul.u32 %v424, 2
        %v437 = vadd.s32 %v435, %v436
        %v438 = vadd.s32 %v437, %v433
        %vm439 = vcmask 523264
        %440 = vst.msk [vmem:[%s415] sm:$0xff] %vm439, %v438
        %v441 = vld [vmem:[%s1] sm:$0x1]
        %v442 = vpack.c.bf16 %v418, %v417
        %v443 = vpack.c.bf16 %v420, %v419
        %vm444 = vcmask 261120
        %v446 = vsel %vm444, %v441, 0
        %448 = vmatprep.subr.bf16.mxu0 0
        %449 = vmatpush1.bf16.msra.mxu0 %v442
        %450 = vmatprep.subr.bf16.mxu0 0
        %451 = vmatpush1.bf16.msra.mxu0 %v443
        %452 = vmatprep.subr.bf16.mxu0 0
        %453 = vmatpush1.bf16.msra.mxu0 0
        %454 = vmatprep.subr.bf16.mxu0 0
        %455 = vmatpush1.bf16.msra.mxu0 0
        %456 = vmatprep.subr.bf16.mxu0 0
        %457 = vmatpush1.bf16.msra.mxu0 0
        %458 = vmatprep.subr.bf16.mxu0 0
        %459 = vmatpush1.bf16.msra.mxu0 0
        %460 = vmatprep.subr.bf16.mxu0 0
        %461 = vmatpush1.bf16.msra.mxu0 0
        %462 = vmatprep.subr.bf16.mxu0 0
        %463 = vmatpush1.bf16.msra.mxu0 0
        %464 = vmatprep.subr.bf16.mxu0 0
        %465 = vmatpush1.bf16.msra.mxu0 0
        %466 = vmatprep.subr.bf16.mxu0 0
        %467 = vmatpush1.bf16.msra.mxu0 0
        %468 = vmatprep.subr.bf16.mxu0 0
        %469 = vmatpush1.bf16.msra.mxu0 0
        %470 = vmatprep.subr.bf16.mxu0 0
        %471 = vmatpush1.bf16.msra.mxu0 0
        %472 = vmatprep.subr.bf16.mxu0 0
        %473 = vmatpush1.bf16.msra.mxu0 0
        %474 = vmatprep.subr.bf16.mxu0 0
        %475 = vmatpush1.bf16.msra.mxu0 0
        %476 = vmatprep.subr.bf16.mxu0 0
        %477 = vmatpush1.bf16.msra.mxu0 0
        %478 = vmatprep.subr.bf16.mxu0 0
        %479 = vmatpush1.bf16.msra.mxu0 0
        %480 = vmatprep.mubr.bf16.mxu0 0
        %481 = vmatmul.mubr.bf16.gmra.mrb[0].mxu0 %v446
        %v482 = vpop.f32.mrb[0].mxu0
        %v483 = vadd.f32 0.0, %v482
        %v484 = vpop.f32.mrb[0].mxu0
        %v485 = vpop.f32.mrb[0].mxu0
        %v486 = vpop.f32.mrb[0].mxu0
        %487 = vdwg.mxu0
        %v488 = vld [vmem:[%s4] sm:$0x3]
        %490 = vset.pattern.permute.xlu0 0
        %491 = vperm.xlu0 %490, %v488
        %v492 = vpop.permute.xlu0 %491
        %v494 = vmul.f32 %v483, %v492
        %v495 = vld [vmem:[%s5] sm:$0x3]
        %497 = vset.pattern.permute.xlu0 0
        %498 = vperm.xlu0 %497, %v495
        %v499 = vpop.permute.xlu0 %498
        %v501 = vadd.f32 %v494, %v499
        %vm502 = vcmp.ge.f32.partialorder %v501, 0.0
        %v503 = vmul.f32 %v501, 0.25
        %v504 = vsel %vm502, %v501, %v503
        %506 = vrot.lane.b32.xlu0 %v504, 9
        %v507 = vpop.permute.xlu0 %506
        %vm509 = vcmask 72704
        %v510 = vsel %vm509, 0.0, %v507
        %vm511 = vcmask 596992
        %v512 = vsel %vm511, %v510, 0.0
        %vm513 = vcmp.ge.s32.totalorder %v423, 1
        %vm514 = vcmp.ge.s32.totalorder %v424, 1
        %vm515 = vmand %vm513, %vm514
        %v516 = vsel %vm515, 1, 0
        %vm517 = vcmp.eq.s32.totalorder %v516, 1
        %v518 = vsel %vm517, %v512, 0.0
        %v519 = vsel %vm513, 1, 0
        %vm520 = vcmp.eq.s32.totalorder %v519, 1
        %522 = vrot.lane.b32.xlu0 %v512, 127
        %v523 = vpop.permute.xlu0 %522
        %v525 = vsel %vm520, %v523, 0.0
        %vm526 = vcmp.le.s32.totalorder %v424, 6
        %vm527 = vmand %vm513, %vm526
        %v528 = vsel %vm527, 1, 0
        %vm529 = vcmp.eq.s32.totalorder %v528, 1
        %530 = vrot.lane.b32.xlu0 %v512, 126
        %v531 = vpop.permute.xlu0 %530
        %v533 = vsel %vm529, %v531, 0.0
        %v534 = vsel %vm514, 1, 0
        %vm535 = vcmp.eq.s32.totalorder %v534, 1
        %536 = vrot.lane.b32.xlu0 %v512, 120
        %v537 = vpop.permute.xlu0 %536
        %v539 = vsel %vm535, %v537, 0.0
        %v540 = vsel %vm526, 1, 0
        %vm541 = vcmp.eq.s32.totalorder %v540, 1
        %542 = vrot.lane.b32.xlu0 %v512, 118
        %v543 = vpop.permute.xlu0 %542
        %v545 = vsel %vm541, %v543, 0.0
        %vm546 = vcmp.le.s32.totalorder %v423, 6
        %vm547 = vmand %vm546, %vm514
        %v548 = vsel %vm547, 1, 0
        %vm549 = vcmp.eq.s32.totalorder %v548, 1
        %550 = vrot.lane.b32.xlu0 %v512, 112
        %v551 = vpop.permute.xlu0 %550
        %v553 = vsel %vm549, %v551, 0.0
        %v554 = vsel %vm546, 1, 0
        %vm555 = vcmp.eq.s32.totalorder %v554, 1
        %556 = vrot.lane.b32.xlu0 %v512, 111
        %v557 = vpop.permute.xlu0 %556
        %v559 = vsel %vm555, %v557, 0.0
        %vm560 = vmand %vm546, %vm526
        %v561 = vsel %vm560, 1, 0
        %vm562 = vcmp.eq.s32.totalorder %v561, 1
        %563 = vrot.lane.b32.xlu0 %v512, 110
        %v564 = vpop.permute.xlu0 %563
        %v566 = vsel %vm562, %v564, 0.0
        %v568 = vrot.slane %v525, 6
        %v571 = vrot.slane %v533, 4
        %v574 = vrot.slane %v539, 2
        %576 = vrot.lane.b32.xlu0 %v512, 119
        %v577 = vpop.permute.xlu0 %576
        %v580 = vrot.slane %v545, 6
        %v583 = vrot.slane %v553, 4
        %v586 = vrot.slane %v559, 2
        %vm588 = vcmask 1041408
        %v589 = vsel %vm588, %v518, %v568
        %vm590 = vcmask 1043456
        %v591 = vsel %vm590, %v589, %v571
        %vm592 = vcmask 1045504
        %v593 = vsel %vm592, %v591, %v574
        %v594 = vsel %vm588, %v577, %v580
        %v595 = vsel %vm590, %v594, %v583
        %v596 = vsel %vm592, %v595, %v586
        %v597 = vld [vmem:[%s2] sm:$0x1]
        %v598 = vpack.c.bf16 %v596, %v593
        %v599 = vpack.c.bf16 %v566, %v566
        %vm600 = vcmask 146432
        %v602 = vsel %vm600, %v597, 0
        %vm604 = vcmask 1040384
        %v606 = vsel %vm604, %v599, 0
        %608 = vmatprep.subr.bf16.mxu0 0
        %609 = vmatpush1.bf16.msra.mxu0 %v598
        %610 = vmatprep.subr.bf16.mxu0 0
        %611 = vmatpush1.bf16.msra.mxu0 %v606
        %612 = vmatprep.subr.bf16.mxu0 0
        %613 = vmatpush1.bf16.msra.mxu0 0
        %614 = vmatprep.subr.bf16.mxu0 0
        %615 = vmatpush1.bf16.msra.mxu0 0
        %616 = vmatprep.subr.bf16.mxu0 0
        %617 = vmatpush1.bf16.msra.mxu0 0
        %618 = vmatprep.subr.bf16.mxu0 0
        %619 = vmatpush1.bf16.msra.mxu0 0
        %620 = vmatprep.subr.bf16.mxu0 0
        %621 = vmatpush1.bf16.msra.mxu0 0
        %622 = vmatprep.subr.bf16.mxu0 0
        %623 = vmatpush1.bf16.msra.mxu0 0
        %624 = vmatprep.subr.bf16.mxu0 0
        %625 = vmatpush1.bf16.msra.mxu0 0
        %626 = vmatprep.subr.bf16.mxu0 0
        %627 = vmatpush1.bf16.msra.mxu0 0
        %628 = vmatprep.subr.bf16.mxu0 0
        %629 = vmatpush1.bf16.msra.mxu0 0
        %630 = vmatprep.subr.bf16.mxu0 0
        %631 = vmatpush1.bf16.msra.mxu0 0
        %632 = vmatprep.subr.bf16.mxu0 0
        %633 = vmatpush1.bf16.msra.mxu0 0
        %634 = vmatprep.subr.bf16.mxu0 0
        %635 = vmatpush1.bf16.msra.mxu0 0
        %636 = vmatprep.subr.bf16.mxu0 0
        %637 = vmatpush1.bf16.msra.mxu0 0
        %638 = vmatprep.subr.bf16.mxu0 0
        %639 = vmatpush1.bf16.msra.mxu0 0
        %640 = vmatprep.mubr.bf16.mxu0 0
        %641 = vmatmul.mubr.bf16.gmra.mrb[0].mxu0 %v602
        %v642 = vpop.f32.mrb[0].mxu0
        %v643 = vadd.f32 0.0, %v642
        %v644 = vpop.f32.mrb[0].mxu0
        %v645 = vpop.f32.mrb[0].mxu0
        %v646 = vpop.f32.mrb[0].mxu0
        %647 = vdwg.mxu0
        %v648 = vld [vmem:[%s6] sm:$0x3]
        %650 = vset.pattern.permute.xlu0 0
        %651 = vperm.xlu0 %650, %v648
        %v652 = vpop.permute.xlu0 %651
        %v654 = vmul.f32 %v643, %v652
        %v655 = vld [vmem:[%s7] sm:$0x3]
        %657 = vset.pattern.permute.xlu0 0
        %658 = vperm.xlu0 %657, %v655
        %v659 = vpop.permute.xlu0 %658
        %v661 = vadd.f32 %v654, %v659
        %vm662 = vcmp.ge.f32.partialorder %v661, 0.0
        %v663 = vmul.f32 %v661, 0.25
        %v664 = vsel %vm662, %v661, %v663
        %v665 = vld [vmem:[%s3] sm:$0xf]
        %v666 = vld [vmem:[%s3 + $0x4] sm:$0xf]
        %v667 = vpack.c.bf16 %v664, %v664
        %v670 = vunpack.c.l.b16 %v665
        %v671 = vunpack.c.l.b16 %v666
        %v672 = vpack.c.b16 %v671, %v670
        %vm673 = vcmask 15360
        %v675 = vsel %vm673, %v672, 0
        %v678 = vsel %vm604, %v667, 0
        %680 = vmatprep.subr.bf16.mxu0 0
        %681 = vmatpush1.bf16.msra.mxu0 %v678
        %682 = vmatprep.subr.bf16.mxu0 0
        %683 = vmatpush1.bf16.msra.mxu0 0
        %684 = vmatprep.subr.bf16.mxu0 0
        %685 = vmatpush1.bf16.msra.mxu0 0
        %686 = vmatprep.subr.bf16.mxu0 0
        %687 = vmatpush1.bf16.msra.mxu0 0
        %688 = vmatprep.subr.bf16.mxu0 0
        %689 = vmatpush1.bf16.msra.mxu0 0
        %690 = vmatprep.subr.bf16.mxu0 0
        %691 = vmatpush1.bf16.msra.mxu0 0
        %692 = vmatprep.subr.bf16.mxu0 0
        %693 = vmatpush1.bf16.msra.mxu0 0
        %694 = vmatprep.subr.bf16.mxu0 0
        %695 = vmatpush1.bf16.msra.mxu0 0
        %696 = vmatprep.subr.bf16.mxu0 0
        %697 = vmatpush1.bf16.msra.mxu0 0
        %698 = vmatprep.subr.bf16.mxu0 0
        %699 = vmatpush1.bf16.msra.mxu0 0
        %700 = vmatprep.subr.bf16.mxu0 0
        %701 = vmatpush1.bf16.msra.mxu0 0
        %702 = vmatprep.subr.bf16.mxu0 0
        %703 = vmatpush1.bf16.msra.mxu0 0
        %704 = vmatprep.subr.bf16.mxu0 0
        %705 = vmatpush1.bf16.msra.mxu0 0
        %706 = vmatprep.subr.bf16.mxu0 0
        %707 = vmatpush1.bf16.msra.mxu0 0
        %708 = vmatprep.subr.bf16.mxu0 0
        %709 = vmatpush1.bf16.msra.mxu0 0
        %710 = vmatprep.subr.bf16.mxu0 0
        %711 = vmatpush1.bf16.msra.mxu0 0
        %712 = vmatprep.mubr.bf16.mxu0 0
        %713 = vmatmul.mubr.bf16.gmra.mrb[0].mxu0 %v675
        %v714 = vpop.f32.mrb[0].mxu0
        %v715 = vadd.f32 0.0, %v714
        %v716 = vpop.f32.mrb[0].mxu0
        %v717 = vpop.f32.mrb[0].mxu0
        %v718 = vadd.f32 0.0, %v717
        %v719 = vpop.f32.mrb[0].mxu0
        %720 = vdwg.mxu0
        %v721 = vld [vmem:[%s8] sm:$0xff]
        %v722 = vld [vmem:[%s8 + $0x8] sm:$0xff]
        %724 = vset.pattern.permute.xlu0 0
        %725 = vperm.xlu0 %724, %v721
        %v726 = vpop.permute.xlu0 %725
        %729 = vset.pattern.permute.xlu0 0
        %730 = vperm.xlu0 %729, %v722
        %v731 = vpop.permute.xlu0 %730
        %v733 = vmul.f32 %v715, %v726
        %v734 = vmul.f32 %v718, %v731
        %v735 = vld [vmem:[%s9] sm:$0xff]
        %v736 = vld [vmem:[%s9 + $0x8] sm:$0xff]
        %738 = vset.pattern.permute.xlu0 0
        %739 = vperm.xlu0 %738, %v735
        %v740 = vpop.permute.xlu0 %739
        %743 = vset.pattern.permute.xlu0 0
        %744 = vperm.xlu0 %743, %v736
        %v745 = vpop.permute.xlu0 %744
        %v747 = vadd.f32 %v733, %v740
        %v748 = vadd.f32 %v734, %v745
        %vm749 = vcmp.ge.f32.partialorder %v747, 0.0
        %vm750 = vcmp.ge.f32.partialorder %v748, 0.0
        %v751 = vmul.f32 %v747, 0.25
        %v752 = vmul.f32 %v748, 0.25
        %v753 = vsel %vm749, %v747, %v751
        %v754 = vsel %vm750, %v748, %v752
        %v755 = vadd.f32 %v432, %v753
        %v756 = vadd.f32 %v754, 0.0
        %vm757 = vcmp.ge.f32.partialorder %v755, 0.0
        %vm758 = vcmp.ge.f32.partialorder %v756, 0.0
        %v759 = vmul.f32 %v755, 0.25
        %v760 = vmul.f32 %v756, 0.25
        %v761 = vsel %vm757, %v755, %v759
        %v762 = vsel %vm758, %v756, %v760
        %763 = vst.msk [vmem:[%s408] sm:$0xff] %vm439, %v761
        %764 = vst.msk [vmem:[%s408 + $0x8] sm:$0xff] %vm439, %v762
        %s765 = sand.u32 %s255, 1
        %s766 = scalar_lea.sflag [#allocation4], %s765
        %s767 = sand.u32 %s255, 1
        %s768 = smul.addr %s767, 16
        %s769 = scalar_lea.vmem [#allocation5], %s768
        %s770 = sand.u32 %s281, 1
        %s771 = scalar_lea.sflag [#allocation7], %s770
        %s772 = sand.u32 %s281, 1
        %s773 = smul.addr %s772, 8
        %s774 = scalar_lea.vmem [#allocation6], %s773
        // Predicated region
        $region65: #{tpu_custom_call.1} parent=59 // pred_check
          %p775 = pneg %p265
        $region66: #{tpu_custom_call.1} parent=59 // pred_check_branch
          %777 = sbr.rel (%p775) target = $region68
        $region67: #{tpu_custom_call.1} parent=59 // pred_region
          %s779 = ssub.s32 256, 256
          %780 = vsyncadd %s766, %s779
          %s781 = smul.addr %s32, 2
          %s782 = smul.addr %s781, 128
          %s783 = scalar_lea.hbm %s10, %s782
          %s784 = sshll.u32 %s769, 4
          %s785 = int_to_ptr.vmem [resolvable:$true] %s784
          %790 = dma.vmem_to_hbm [thread:$0]  %s785, 256, %s783, %s766, 128, 128, 8
        $region68: #{tpu_custom_call.1} parent=59 // pred_fallthru
          _
        // Predicated region
        $region69: #{tpu_custom_call.1} parent=59 // pred_check
          %p791 = pneg %p291
        $region70: #{tpu_custom_call.1} parent=59 // pred_check_branch
          %793 = sbr.rel (%p791) target = $region72
        $region71: #{tpu_custom_call.1} parent=59 // pred_region
          %s795 = ssub.s32 128, 128
          %796 = vsyncadd %s771, %s795
          %s797 = smul.addr %s32, 128
          %s798 = scalar_lea.hbm %s11, %s797
          %s800 = sshll.u32 %s774, 4
          %s801 = int_to_ptr.vmem [resolvable:$true] %s800
          %803 = dma.vmem_to_hbm [thread:$0]  %s801, 128, %s798, %s771
        $region72: #{tpu_custom_call.1} parent=59 // pred_fallthru
          _
      $region60: #{tpu_custom_call.1} parent=5 // pred_fallthru
        _
      %p804 = scmp.le.s32.totalorder 2, %s27
      // Predicated region
      $region73: #{tpu_custom_call.1} parent=5 // pred_check
        %p805 = pneg %p804
      $region74: #{tpu_custom_call.1} parent=5 // pred_check_branch
        %807 = sbr.rel (%p805) target = $region76
      $region75: #{tpu_custom_call.1} parent=5 // pred_region
        %s808 = ssub.s32 %s27, 2
        // Predicated region
        $region77: #{tpu_custom_call.1} parent=75 // pred_check
          %p809 = pneg %p271
        $region78: #{tpu_custom_call.1} parent=75 // pred_check_branch
          %811 = sbr.rel (%p809) target = $region80
        $region79: #{tpu_custom_call.1} parent=75 // pred_region
          %s812 = sand.u32 %s256, 1
          %s813 = scalar_lea.sflag [#allocation4], %s812
          %s814 = sand.u32 %s256, 1
          %s815 = smul.addr %s814, 16
          %s816 = scalar_lea.vmem [#allocation5], %s815
          %817 = dma.done %s813, 256
        $region80: #{tpu_custom_call.1} parent=75 // pred_fallthru
          _
        // Predicated region
        $region81: #{tpu_custom_call.1} parent=75 // pred_check
          %p818 = pneg %p297
        $region82: #{tpu_custom_call.1} parent=75 // pred_check_branch
          %820 = sbr.rel (%p818) target = $region84
        $region83: #{tpu_custom_call.1} parent=75 // pred_region
          %s821 = sand.u32 %s282, 1
          %s822 = scalar_lea.sflag [#allocation7], %s821
          %s823 = sand.u32 %s282, 1
          %s824 = smul.addr %s823, 8
          %s825 = scalar_lea.vmem [#allocation6], %s824
          %826 = dma.done %s822, 128
        $region84: #{tpu_custom_call.1} parent=75 // pred_fallthru
          _
      $region76: #{tpu_custom_call.1} parent=5 // pred_fallthru
        _
    $region6: #{tpu_custom_call.1} parent=1 // loop_footer
      %s31 = sadd.s32 1, %s27
    $region7: #{tpu_custom_call.1} parent=1 // loop_footer_branch
      %26 = sbr.rel target = $region3
    $region8: #{tpu_custom_call.1} parent=1 // loop_exit
      _
    %827 = vsyncpa [#allocation3], 1
    %s828 = scalar_lea.sflag [#allocation3], 1
    %829 = vsyncpa %s828, 1
    %830 = vsyncpa [#allocation4], 1
    %s831 = scalar_lea.sflag [#allocation4], 1
    %832 = vsyncpa %s831, 1
    %833 = vsyncpa [#allocation7], 1
    %s834 = scalar_lea.sflag [#allocation7], 1
    %835 = vsyncpa %s834, 1

</llo_original>
